<compile_context>
chip_gen: v5e
topology: v5e:2x2
jax: 0.10.0
libtpu: 0.0.40
codegen_flags: <defaults>
</compile_context>

<pallas_src>
import functools

import jax
import jax.numpy as jnp
from jax.experimental import pallas as pl
from jax.experimental.pallas import tpu as pltpu

LANE = 128  # TPU lane width; all feature dims are padded to a multiple of this.


def _round_up(n, m):
    return ((n + m - 1) // m) * m


def _mlp_softmax_kernel(x_ref,
                        w1_ref, b1_ref,
                        w2_ref, b2_ref,
                        w3_ref, b3_ref,
                        w4_ref, b4_ref,
                        out_ref,
                        *, valid_v):
    """Whole forward pass for one batch tile, entirely in VMEM.

    Dots are bf16 x bf16 -> f32 (MXU native path); bias add, ReLU and the
    softmax run in f32 on the VPU/EUP. Padded vocab lanes are masked to -inf
    before the softmax so they contribute exactly zero probability.
    """
    x = x_ref[...]  # bf16 (tile, D0)

    # lay1 + relu1
    h = jnp.dot(x, w1_ref[...], preferred_element_type=jnp.float32) + b1_ref[...]
    h = jnp.maximum(h, 0.0).astype(jnp.bfloat16)

    # lay2 + relu2
    h = jnp.dot(h, w2_ref[...], preferred_element_type=jnp.float32) + b2_ref[...]
    h = jnp.maximum(h, 0.0).astype(jnp.bfloat16)

    # lay3 + relu3
    h = jnp.dot(h, w3_ref[...], preferred_element_type=jnp.float32) + b3_ref[...]
    h = jnp.maximum(h, 0.0).astype(jnp.bfloat16)

    # lay4
    logits = jnp.dot(h, w4_ref[...], preferred_element_type=jnp.float32) + b4_ref[...]

    # Mask lane-padding of the vocab dimension out of the softmax.
    if valid_v < logits.shape[-1]:
        col = jax.lax.broadcasted_iota(jnp.int32, logits.shape, dimension=1)
        logits = jnp.where(col < valid_v, logits, -jnp.inf)

    # Numerically stable softmax over dim=1 (last axis).
    m = jnp.max(logits, axis=-1, keepdims=True)
    e = jnp.exp(logits - m)
    denom = jnp.sum(e, axis=-1, keepdims=True)
    out_ref[...] = (e * pl.reciprocal(denom, approx=True)).astype(out_ref.dtype)


@functools.partial(jax.jit, static_argnames=("batch_tile",))
def word_embedding_forward(x, params, *, batch_tile=128):
    """x: (B, vocab_size*context_size) f32 -> (B, vocab_size) f32 softmax probs.

    For very large batches on v7x, pick batch_tile <= B/2 so the grid has >= 2
    "parallel" steps and both TensorCores are busy (no effect on v5e/v6e).
    """
    w1, b1, w2, b2, w3, b3, w4, b4 = params
    B, D_in = x.shape
    V = w4.shape[1]

    # Lane-padded feature sizes (free on the MXU; keeps every store lane-dense).
    D0 = _round_up(D_in, LANE)
    D1 = _round_up(w1.shape[1], LANE)
    D2 = _round_up(w2.shape[1], LANE)
    D3 = _round_up(w3.shape[1], LANE)
    D4 = _round_up(V, LANE)
    Bp = _round_up(B, batch_tile)

    def pad2(a, rows, cols, dtype):
        return jnp.pad(a, ((0, rows - a.shape[0]), (0, cols - a.shape[1]))).astype(dtype)

    # Zero-padding is semantics-preserving: padded hidden columns are
    # ReLU(0 + 0) = 0 and padded weight rows are 0, so they contribute nothing;
    # padded vocab columns are masked to -inf in the kernel before the softmax.
    xp = pad2(x, Bp, D0, jnp.bfloat16)
    w1p, b1p = pad2(w1, D0, D1, jnp.bfloat16), pad2(b1, 1, D1, jnp.float32)
    w2p, b2p = pad2(w2, D1, D2, jnp.bfloat16), pad2(b2, 1, D2, jnp.float32)
    w3p, b3p = pad2(w3, D2, D3, jnp.bfloat16), pad2(b3, 1, D3, jnp.float32)
    w4p, b4p = pad2(w4, D3, D4, jnp.bfloat16), pad2(b4, 1, D4, jnp.float32)

    grid = (Bp // batch_tile,)

    # Weights/biases are replicated (full block, constant index_map); x/out are
    # tiled over the batch.
    def full_spec(shape):
        return pl.BlockSpec(shape, lambda i: tuple(0 for _ in shape))

    out_padded = pl.pallas_call(
        functools.partial(_mlp_softmax_kernel, valid_v=V),
        out_shape=jax.ShapeDtypeStruct((Bp, D4), jnp.float32),
        grid_spec=pltpu.PrefetchScalarGridSpec(
            num_scalar_prefetch=0,
            grid=grid,
            in_specs=[
                pl.BlockSpec((batch_tile, D0), lambda i: (i, 0)),
                full_spec(w1p.shape), full_spec(b1p.shape),
                full_spec(w2p.shape), full_spec(b2p.shape),
                full_spec(w3p.shape), full_spec(b3p.shape),
                full_spec(w4p.shape), full_spec(b4p.shape),
            ],
            out_specs=pl.BlockSpec((batch_tile, D4), lambda i: (i, 0)),
        ),
        compiler_params=pltpu.CompilerParams(
            dimension_semantics=("parallel",),  # batch steps shard across TCs on v7x
        ),
    )(xp, w1p, b1p, w2p, b2p, w3p, b3p, w4p, b4p)

    # Strip batch / vocab padding.
    return out_padded[:B, :V]


def init_params(key, vocab_size, embedding_dim, context_size):
    """Deterministic synthetic parameters.

    Weights are stored as (in_features, out_features); biases as (1, out)."""
    dims = [
        (vocab_size * context_size, 64),   # lay1
        (64, embedding_dim),               # lay2
        (embedding_dim, vocab_size),       # lay3
        (vocab_size, vocab_size),          # lay4
    ]
    params = []
    for (d_in, d_out) in dims:
        key, kw, kb = jax.random.split(key, 3)
        bound = 1.0 / jnp.sqrt(d_in)  # PyTorch-style uniform init range
        w = jax.random.uniform(kw, (d_in, d_out), jnp.float32, -bound, bound)
        b = jax.random.uniform(kb, (1, d_out), jnp.float32, -bound, bound)
        params.extend([w, b])
    return tuple(params)


def reference_forward(x, params):
    """Pure-JAX f32 reference mirroring the PyTorch module."""
    w1, b1, w2, b2, w3, b3, w4, b4 = params
    h = jnp.maximum(x @ w1 + b1, 0.0)
    h = jnp.maximum(h @ w2 + b2, 0.0)
    h = jnp.maximum(h @ w3 + b3, 0.0)
    logits = h @ w4 + b4
    return jax.nn.softmax(logits, axis=1)


if __name__ == "__main__":
    # Small shapes consistent with the module's forward.
    vocab_size = 32
    embedding_dim = 16
    context_size = 4
    batch = 8

    key = jax.random.PRNGKey(0)
    key, kx = jax.random.split(key)
    params = init_params(key, vocab_size, embedding_dim, context_size)
    x = jax.random.normal(kx, (batch, vocab_size * context_size), jnp.float32)

    out = jax.block_until_ready(word_embedding_forward(x, params))
    ref = reference_forward(x, params)
    assert out.shape == (batch, vocab_size)
    # bf16 matmuls + approx reciprocal -> compare with a modest tolerance.
    assert jnp.allclose(out, ref, atol=1e-2, rtol=2e-2), float(jnp.max(jnp.abs(out - ref)))
    assert jnp.allclose(jnp.sum(out, axis=1), 1.0, atol=5e-3)

    # Non-multiple batch: exercises batch padding and a 2-step parallel grid
    # (both TensorCores on v7x).
    key, kx2 = jax.random.split(key)
    x2 = jax.random.normal(kx2, (200, vocab_size * context_size), jnp.float32)
    out2 = jax.block_until_ready(word_embedding_forward(x2, params))
    ref2 = reference_forward(x2, params)
    assert out2.shape == (200, vocab_size)
    assert jnp.allclose(out2, ref2, atol=1e-2, rtol=2e-2)
    assert jnp.allclose(jnp.sum(out2, axis=1), 1.0, atol=5e-3)

    print("KERNEL_OK")
</pallas_src>

<mosaic_0001>
module attributes {stable_mosaic.version = 11 : i64} {
  func.func @_mlp_softmax_kernel(%arg0: i32, %arg1: memref<128x128xbf16, #tpu.memory_space<vmem>>, %arg2: memref<128x128xbf16, #tpu.memory_space<vmem>>, %arg3: memref<1x128xf32, #tpu.memory_space<vmem>>, %arg4: memref<128x128xbf16, #tpu.memory_space<vmem>>, %arg5: memref<1x128xf32, #tpu.memory_space<vmem>>, %arg6: memref<128x128xbf16, #tpu.memory_space<vmem>>, %arg7: memref<1x128xf32, #tpu.memory_space<vmem>>, %arg8: memref<128x128xbf16, #tpu.memory_space<vmem>>, %arg9: memref<1x128xf32, #tpu.memory_space<vmem>>, %arg10: memref<128x128xf32, #tpu.memory_space<vmem>>) attributes {dimension_semantics = [#tpu.dimension_semantics<parallel>], iteration_bounds = array<i64: 1>, scalar_prefetch = 0 : i64, scratch_operands = 0 : i64, tpu.core_type = #tpu.core_type<tc>, window_params = [{transform_indices = @transform_0, window_bounds = array<i64: 128, 128>}, {pipeline_mode = #tpu.pipeline_mode<synchronous>, transform_indices = @transform_1, window_bounds = array<i64: 128, 128>}, {pipeline_mode = #tpu.pipeline_mode<synchronous>, transform_indices = @transform_2, window_bounds = array<i64: 1, 128>}, {pipeline_mode = #tpu.pipeline_mode<synchronous>, transform_indices = @transform_3, window_bounds = array<i64: 128, 128>}, {pipeline_mode = #tpu.pipeline_mode<synchronous>, transform_indices = @transform_4, window_bounds = array<i64: 1, 128>}, {pipeline_mode = #tpu.pipeline_mode<synchronous>, transform_indices = @transform_5, window_bounds = array<i64: 128, 128>}, {pipeline_mode = #tpu.pipeline_mode<synchronous>, transform_indices = @transform_6, window_bounds = array<i64: 1, 128>}, {pipeline_mode = #tpu.pipeline_mode<synchronous>, transform_indices = @transform_7, window_bounds = array<i64: 128, 128>}, {pipeline_mode = #tpu.pipeline_mode<synchronous>, transform_indices = @transform_8, window_bounds = array<i64: 1, 128>}, {transform_indices = @transform_9, window_bounds = array<i64: 128, 128>}]} {
    %c0 = arith.constant 0 : index
    %c0_0 = arith.constant 0 : index
    %0 = vector.load %arg1[%c0, %c0_0] : memref<128x128xbf16, #tpu.memory_space<vmem>>, vector<128x128xbf16>
    %c0_1 = arith.constant 0 : index
    %c0_2 = arith.constant 0 : index
    %1 = vector.load %arg2[%c0_1, %c0_2] : memref<128x128xbf16, #tpu.memory_space<vmem>>, vector<128x128xbf16>
    %cst = arith.constant dense<0.000000e+00> : vector<128x128xf32>
    %2 = tpu.matmul %0, %1, %cst {dimension_numbers = #tpu.dot_dimension_numbers<[1], [0], [0], [1], [0, 0, 1, 1], [], []>} : vector<128x128xbf16>, vector<128x128xbf16>, vector<128x128xf32> -> vector<128x128xf32>
    %c0_3 = arith.constant 0 : index
    %c0_4 = arith.constant 0 : index
    %3 = vector.load %arg3[%c0_3, %c0_4] : memref<1x128xf32, #tpu.memory_space<vmem>>, vector<1x128xf32>
    %4 = vector.broadcast %3 : vector<1x128xf32> to vector<128x128xf32>
    %5 = arith.addf %2, %4 : vector<128x128xf32>
    %cst_5 = arith.constant 0.000000e+00 : f32
    %6 = vector.broadcast %cst_5 : f32 to vector<128x128xf32>
    %7 = arith.maximumf %5, %6 : vector<128x128xf32>
    %8 = arith.truncf %7 : vector<128x128xf32> to vector<128x128xbf16>
    %c0_6 = arith.constant 0 : index
    %c0_7 = arith.constant 0 : index
    %9 = vector.load %arg4[%c0_6, %c0_7] : memref<128x128xbf16, #tpu.memory_space<vmem>>, vector<128x128xbf16>
    %cst_8 = arith.constant dense<0.000000e+00> : vector<128x128xf32>
    %10 = tpu.matmul %8, %9, %cst_8 {dimension_numbers = #tpu.dot_dimension_numbers<[1], [0], [0], [1], [0, 0, 1, 1], [], []>} : vector<128x128xbf16>, vector<128x128xbf16>, vector<128x128xf32> -> vector<128x128xf32>
    %c0_9 = arith.constant 0 : index
    %c0_10 = arith.constant 0 : index
    %11 = vector.load %arg5[%c0_9, %c0_10] : memref<1x128xf32, #tpu.memory_space<vmem>>, vector<1x128xf32>
    %12 = vector.broadcast %11 : vector<1x128xf32> to vector<128x128xf32>
    %13 = arith.addf %10, %12 : vector<128x128xf32>
    %cst_11 = arith.constant 0.000000e+00 : f32
    %14 = vector.broadcast %cst_11 : f32 to vector<128x128xf32>
    %15 = arith.maximumf %13, %14 : vector<128x128xf32>
    %16 = arith.truncf %15 : vector<128x128xf32> to vector<128x128xbf16>
    %c0_12 = arith.constant 0 : index
    %c0_13 = arith.constant 0 : index
    %17 = vector.load %arg6[%c0_12, %c0_13] : memref<128x128xbf16, #tpu.memory_space<vmem>>, vector<128x128xbf16>
    %cst_14 = arith.constant dense<0.000000e+00> : vector<128x128xf32>
    %18 = tpu.matmul %16, %17, %cst_14 {dimension_numbers = #tpu.dot_dimension_numbers<[1], [0], [0], [1], [0, 0, 1, 1], [], []>} : vector<128x128xbf16>, vector<128x128xbf16>, vector<128x128xf32> -> vector<128x128xf32>
    %c0_15 = arith.constant 0 : index
    %c0_16 = arith.constant 0 : index
    %19 = vector.load %arg7[%c0_15, %c0_16] : memref<1x128xf32, #tpu.memory_space<vmem>>, vector<1x128xf32>
    %20 = vector.broadcast %19 : vector<1x128xf32> to vector<128x128xf32>
    %21 = arith.addf %18, %20 : vector<128x128xf32>
    %cst_17 = arith.constant 0.000000e+00 : f32
    %22 = vector.broadcast %cst_17 : f32 to vector<128x128xf32>
    %23 = arith.maximumf %21, %22 : vector<128x128xf32>
    %24 = arith.truncf %23 : vector<128x128xf32> to vector<128x128xbf16>
    %c0_18 = arith.constant 0 : index
    %c0_19 = arith.constant 0 : index
    %25 = vector.load %arg8[%c0_18, %c0_19] : memref<128x128xbf16, #tpu.memory_space<vmem>>, vector<128x128xbf16>
    %cst_20 = arith.constant dense<0.000000e+00> : vector<128x128xf32>
    %26 = tpu.matmul %24, %25, %cst_20 {dimension_numbers = #tpu.dot_dimension_numbers<[1], [0], [0], [1], [0, 0, 1, 1], [], []>} : vector<128x128xbf16>, vector<128x128xbf16>, vector<128x128xf32> -> vector<128x128xf32>
    %c0_21 = arith.constant 0 : index
    %c0_22 = arith.constant 0 : index
    %27 = vector.load %arg9[%c0_21, %c0_22] : memref<1x128xf32, #tpu.memory_space<vmem>>, vector<1x128xf32>
    %28 = vector.broadcast %27 : vector<1x128xf32> to vector<128x128xf32>
    %29 = arith.addf %26, %28 : vector<128x128xf32>
    %30 = tpu.iota {dimensions = array<i32: 1>} : vector<128x128xi32>
    %c32_i32 = arith.constant 32 : i32
    %31 = vector.broadcast %c32_i32 : i32 to vector<128x128xi32>
    %32 = arith.cmpi slt, %30, %31 : vector<128x128xi32>
    %cst_23 = arith.constant 0xFF800000 : f32
    %33 = vector.broadcast %cst_23 : f32 to vector<128x128xf32>
    %34 = arith.select %32, %29, %33 : vector<128x128xi1>, vector<128x128xf32>
    %cst_24 = arith.constant dense<0xFF800000> : vector<128xf32>
    %35 = vector.multi_reduction <maximumf>, %34, %cst_24 [1] : vector<128x128xf32> to vector<128xf32>
    %36 = vector.shape_cast %35 : vector<128xf32> to vector<128x1xf32>
    %37 = vector.broadcast %36 : vector<128x1xf32> to vector<128x128xf32>
    %38 = arith.subf %34, %37 : vector<128x128xf32>
    %39 = math.exp %38 : vector<128x128xf32>
    %cst_25 = arith.constant dense<0.000000e+00> : vector<128xf32>
    %40 = vector.multi_reduction <add>, %39, %cst_25 [1] : vector<128x128xf32> to vector<128xf32>
    %41 = vector.shape_cast %40 : vector<128xf32> to vector<128x1xf32>
    %42 = tpu.reciprocal %41 {approx = true} : vector<128x1xf32> -> vector<128x1xf32>
    %43 = vector.broadcast %42 : vector<128x1xf32> to vector<128x128xf32>
    %44 = arith.mulf %39, %43 : vector<128x128xf32>
    %c0_26 = arith.constant 0 : index
    %c0_27 = arith.constant 0 : index
    %45 = vector.load %arg10[%c0_26, %c0_27] : memref<128x128xf32, #tpu.memory_space<vmem>>, vector<128x128xf32>
    tpu.vector_store %arg10[%c0_26, %c0_27], %44 {strides = array<i32>} : memref<128x128xf32, #tpu.memory_space<vmem>>, vector<128x128xf32>,
    return
  }
  func.func @transform_0(%arg0: i32) -> (i32, i32) {
    %c0_i32 = arith.constant 0 : i32
    %c0_i32_0 = arith.constant 0 : i32
    return %arg0, %c0_i32 : i32, i32
  }
  func.func @transform_1(%arg0: i32) -> (i32, i32) {
    %c0_i32 = arith.constant 0 : i32
    %c0_i32_0 = arith.constant 0 : i32
    %c0_i32_1 = arith.constant 0 : i32
    return %c0_i32, %c0_i32_0 : i32, i32
  }
  func.func @transform_2(%arg0: i32) -> (i32, i32) {
    %c0_i32 = arith.constant 0 : i32
    %c0_i32_0 = arith.constant 0 : i32
    %c0_i32_1 = arith.constant 0 : i32
    return %c0_i32, %c0_i32_0 : i32, i32
  }
  func.func @transform_3(%arg0: i32) -> (i32, i32) {
    %c0_i32 = arith.constant 0 : i32
    %c0_i32_0 = arith.constant 0 : i32
    %c0_i32_1 = arith.constant 0 : i32
    return %c0_i32, %c0_i32_0 : i32, i32
  }
  func.func @transform_4(%arg0: i32) -> (i32, i32) {
    %c0_i32 = arith.constant 0 : i32
    %c0_i32_0 = arith.constant 0 : i32
    %c0_i32_1 = arith.constant 0 : i32
    return %c0_i32, %c0_i32_0 : i32, i32
  }
  func.func @transform_5(%arg0: i32) -> (i32, i32) {
    %c0_i32 = arith.constant 0 : i32
    %c0_i32_0 = arith.constant 0 : i32
    %c0_i32_1 = arith.constant 0 : i32
    return %c0_i32, %c0_i32_0 : i32, i32
  }
  func.func @transform_6(%arg0: i32) -> (i32, i32) {
    %c0_i32 = arith.constant 0 : i32
    %c0_i32_0 = arith.constant 0 : i32
    %c0_i32_1 = arith.constant 0 : i32
    return %c0_i32, %c0_i32_0 : i32, i32
  }
  func.func @transform_7(%arg0: i32) -> (i32, i32) {
    %c0_i32 = arith.constant 0 : i32
    %c0_i32_0 = arith.constant 0 : i32
    %c0_i32_1 = arith.constant 0 : i32
    return %c0_i32, %c0_i32_0 : i32, i32
  }
  func.func @transform_8(%arg0: i32) -> (i32, i32) {
    %c0_i32 = arith.constant 0 : i32
    %c0_i32_0 = arith.constant 0 : i32
    %c0_i32_1 = arith.constant 0 : i32
    return %c0_i32, %c0_i32_0 : i32, i32
  }
  func.func @transform_9(%arg0: i32) -> (i32, i32) {
    %c0_i32 = arith.constant 0 : i32
    %c0_i32_0 = arith.constant 0 : i32
    return %arg0, %c0_i32 : i32, i32
  }
}

</mosaic_0001>

<llo_original>
// kernel: word_embedding_forward.1
$region0: #{word_embedding_forward.1}
  #allocation0 [shape = 'u32[]', space=smem, size = 0x4, offset = 0x4, fixed_abs, tag = 'smem constant byte address 0x4 - core index']
  #allocation1 [shape = 'u32[72,128]{1,0:T(1,128)}', space=vmem, size = 0x9000, scoped, tag = 'internal scratch']
  %s0 = inlined_call_operand.vmem [shape: bf16[128,128], index: 0, kind: input, shape index: {}]
  %s1 = inlined_call_operand.vmem [shape: bf16[128,128], index: 1, kind: input, shape index: {}]
  %s2 = inlined_call_operand.vmem [shape: f32[1,128], index: 2, kind: input, shape index: {}]
  %s3 = inlined_call_operand.vmem [shape: bf16[128,128], index: 3, kind: input, shape index: {}]
  %s4 = inlined_call_operand.vmem [shape: f32[1,128], index: 4, kind: input, shape index: {}]
  %s5 = inlined_call_operand.vmem [shape: bf16[128,128], index: 5, kind: input, shape index: {}]
  %s6 = inlined_call_operand.vmem [shape: f32[1,128], index: 6, kind: input, shape index: {}]
  %s7 = inlined_call_operand.vmem [shape: bf16[128,128], index: 7, kind: input, shape index: {}]
  %s8 = inlined_call_operand.vmem [shape: f32[1,128], index: 8, kind: input, shape index: {}]
  %s9 = inlined_call_operand.vmem [shape: f32[128,128], index: 9, kind: output, shape index: {}]
  %s10 = sld [smem:[#allocation0]]
  $region46: #{word_embedding_forward.1} parent=0
    _
  %s12 = ssub.s32 1, %s10
  %s13 = scalar_select 0, %s12, %s10
  // Predicated region
  $region2: #{word_embedding_forward.1} parent=0 // pred_check
    _
  $region3: #{word_embedding_forward.1} parent=0 // pred_check_branch
    %15 = sbr.rel (0) target = $region5
  $region4: #{word_embedding_forward.1} parent=0 // pred_region
    _
  $region5: #{word_embedding_forward.1} parent=0 // pred_fallthru
    _
  // Predicated region
  $region6: #{word_embedding_forward.1} parent=0 // pred_check
    _
  $region7: #{word_embedding_forward.1} parent=0 // pred_check_branch
    %17 = sbr.rel (0) target = $region9
  $region8: #{word_embedding_forward.1} parent=0 // pred_region
    _
  $region9: #{word_embedding_forward.1} parent=0 // pred_fallthru
    _
  // Predicated region
  $region10: #{word_embedding_forward.1} parent=0 // pred_check
    _
  $region11: #{word_embedding_forward.1} parent=0 // pred_check_branch
    %19 = sbr.rel (0) target = $region13
  $region12: #{word_embedding_forward.1} parent=0 // pred_region
    _
  $region13: #{word_embedding_forward.1} parent=0 // pred_fallthru
    _
  // Predicated region
  $region14: #{word_embedding_forward.1} parent=0 // pred_check
    _
  $region15: #{word_embedding_forward.1} parent=0 // pred_check_branch
    %21 = sbr.rel (0) target = $region17
  $region16: #{word_embedding_forward.1} parent=0 // pred_region
    _
  $region17: #{word_embedding_forward.1} parent=0 // pred_fallthru
    _
  // Predicated region
  $region18: #{word_embedding_forward.1} parent=0 // pred_check
    _
  $region19: #{word_embedding_forward.1} parent=0 // pred_check_branch
    %23 = sbr.rel (0) target = $region21
  $region20: #{word_embedding_forward.1} parent=0 // pred_region
    _
  $region21: #{word_embedding_forward.1} parent=0 // pred_fallthru
    _
  // Predicated region
  $region22: #{word_embedding_forward.1} parent=0 // pred_check
    _
  $region23: #{word_embedding_forward.1} parent=0 // pred_check_branch
    %25 = sbr.rel (0) target = $region25
  $region24: #{word_embedding_forward.1} parent=0 // pred_region
    _
  $region25: #{word_embedding_forward.1} parent=0 // pred_fallthru
    _
  // Predicated region
  $region26: #{word_embedding_forward.1} parent=0 // pred_check
    _
  $region27: #{word_embedding_forward.1} parent=0 // pred_check_branch
    %27 = sbr.rel (0) target = $region29
  $region28: #{word_embedding_forward.1} parent=0 // pred_region
    _
  $region29: #{word_embedding_forward.1} parent=0 // pred_fallthru
    _
  // Predicated region
  $region30: #{word_embedding_forward.1} parent=0 // pred_check
    _
  $region31: #{word_embedding_forward.1} parent=0 // pred_check_branch
    %29 = sbr.rel (0) target = $region33
  $region32: #{word_embedding_forward.1} parent=0 // pred_region
    _
  $region33: #{word_embedding_forward.1} parent=0 // pred_fallthru
    _
  // Predicated region
  $region34: #{word_embedding_forward.1} parent=0 // pred_check
    _
  $region35: #{word_embedding_forward.1} parent=0 // pred_check_branch
    %31 = sbr.rel (0) target = $region37
  $region36: #{word_embedding_forward.1} parent=0 // pred_region
    _
  $region37: #{word_embedding_forward.1} parent=0 // pred_fallthru
    _
  %v32 = vld [vmem:[%s0] sm:$0xf]
  %v33 = vld [vmem:[%s0 + $0x4] sm:$0xf]
  %v34 = vld [vmem:[%s0 + $0x8] sm:$0xf]
  %v35 = vld [vmem:[%s0 + $0xc] sm:$0xf]
  %v36 = vld [vmem:[%s0 + $0x10] sm:$0xf]
  %v37 = vld [vmem:[%s0 + $0x14] sm:$0xf]
  %v38 = vld [vmem:[%s0 + $0x18] sm:$0xf]
  %v39 = vld [vmem:[%s0 + $0x1c] sm:$0xf]
  %v40 = vld [vmem:[%s0 + $0x20] sm:$0xf]
  %v41 = vld [vmem:[%s0 + $0x24] sm:$0xf]
  %v42 = vld [vmem:[%s0 + $0x28] sm:$0xf]
  %v43 = vld [vmem:[%s0 + $0x2c] sm:$0xf]
  %v44 = vld [vmem:[%s0 + $0x30] sm:$0xf]
  %v45 = vld [vmem:[%s0 + $0x34] sm:$0xf]
  %v46 = vld [vmem:[%s0 + $0x38] sm:$0xf]
  %v47 = vld [vmem:[%s0 + $0x3c] sm:$0xf]
  %v48 = vld [vmem:[%s1] sm:$0xf]
  %v49 = vld [vmem:[%s1 + $0x4] sm:$0xf]
  %v50 = vld [vmem:[%s1 + $0x8] sm:$0xf]
  %v51 = vld [vmem:[%s1 + $0xc] sm:$0xf]
  %v52 = vld [vmem:[%s1 + $0x10] sm:$0xf]
  %v53 = vld [vmem:[%s1 + $0x14] sm:$0xf]
  %v54 = vld [vmem:[%s1 + $0x18] sm:$0xf]
  %v55 = vld [vmem:[%s1 + $0x1c] sm:$0xf]
  %v56 = vld [vmem:[%s1 + $0x20] sm:$0xf]
  %v57 = vld [vmem:[%s1 + $0x24] sm:$0xf]
  %v58 = vld [vmem:[%s1 + $0x28] sm:$0xf]
  %v59 = vld [vmem:[%s1 + $0x2c] sm:$0xf]
  %v60 = vld [vmem:[%s1 + $0x30] sm:$0xf]
  %v61 = vld [vmem:[%s1 + $0x34] sm:$0xf]
  %v62 = vld [vmem:[%s1 + $0x38] sm:$0xf]
  %v63 = vld [vmem:[%s1 + $0x3c] sm:$0xf]
  %v64 = vld [vmem:[%s2] sm:$0x1]
  %v66 = vperm.slane %v64, 0
  %v84 = vunpack.c.l.b16 %v32
  %v85 = vunpack.c.l.b16 %v33
  %v86 = vunpack.c.l.b16 %v34
  %v87 = vunpack.c.l.b16 %v35
  %v88 = vunpack.c.l.b16 %v36
  %v89 = vunpack.c.l.b16 %v37
  %v90 = vunpack.c.l.b16 %v38
  %v91 = vunpack.c.l.b16 %v39
  %v92 = vunpack.c.l.b16 %v40
  %v93 = vunpack.c.l.b16 %v41
  %v94 = vunpack.c.l.b16 %v42
  %v95 = vunpack.c.l.b16 %v43
  %v96 = vunpack.c.l.b16 %v44
  %v97 = vunpack.c.l.b16 %v45
  %v98 = vunpack.c.l.b16 %v46
  %v99 = vunpack.c.l.b16 %v47
  %v100 = vpack.c.b16 %v85, %v84
  %v101 = vpack.c.b16 %v87, %v86
  %v102 = vpack.c.b16 %v89, %v88
  %v103 = vpack.c.b16 %v91, %v90
  %v104 = vpack.c.b16 %v93, %v92
  %v105 = vpack.c.b16 %v95, %v94
  %v106 = vpack.c.b16 %v97, %v96
  %v107 = vpack.c.b16 %v99, %v98
  %v132 = vunpack.c.l.b16 %v48
  %v133 = vunpack.c.l.b16 %v49
  %v134 = vunpack.c.l.b16 %v50
  %v135 = vunpack.c.l.b16 %v51
  %v136 = vunpack.c.l.b16 %v52
  %v137 = vunpack.c.l.b16 %v53
  %v138 = vunpack.c.l.b16 %v54
  %v139 = vunpack.c.l.b16 %v55
  %v140 = vunpack.c.l.b16 %v56
  %v141 = vunpack.c.l.b16 %v57
  %v142 = vunpack.c.l.b16 %v58
  %v143 = vunpack.c.l.b16 %v59
  %v144 = vunpack.c.l.b16 %v60
  %v145 = vunpack.c.l.b16 %v61
  %v146 = vunpack.c.l.b16 %v62
  %v147 = vunpack.c.l.b16 %v63
  %v148 = vpack.c.b16 %v133, %v132
  %v149 = vpack.c.b16 %v135, %v134
  %v150 = vpack.c.b16 %v137, %v136
  %v151 = vpack.c.b16 %v139, %v138
  %v152 = vpack.c.b16 %v141, %v140
  %v153 = vpack.c.b16 %v143, %v142
  %v154 = vpack.c.b16 %v145, %v144
  %v155 = vpack.c.b16 %v147, %v146
  %164 = vmatpush.bf16.msra.mxu0 %v155
  %165 = vmatpush.bf16.msra.mxu0 %v154
  %166 = vmatpush.bf16.msra.mxu0 %v153
  %167 = vmatpush.bf16.msra.mxu0 %v152
  %168 = vmatpush.bf16.msra.mxu0 %v151
  %169 = vmatpush.bf16.msra.mxu0 %v150
  %170 = vmatpush.bf16.msra.mxu0 %v149
  %171 = vmatpush.bf16.msra.mxu0 %v148
  %172 = vmatmul.bf16.gmra.mxu0 %v100
  %v173 = vpop.f32.mrf.mxu0
  %v174 = vadd.f32 %v66, %v173
  %v175 = vpop.f32.mrf.mxu0
  %v176 = vadd.f32 %v66, %v175
  %177 = vmatmul.bf16.gmra.mxu0 %v101
  %v178 = vpop.f32.mrf.mxu0
  %v179 = vadd.f32 %v66, %v178
  %v180 = vpop.f32.mrf.mxu0
  %v181 = vadd.f32 %v66, %v180
  %182 = vmatmul.bf16.gmra.mxu0 %v102
  %v183 = vpop.f32.mrf.mxu0
  %v184 = vadd.f32 %v66, %v183
  %v185 = vpop.f32.mrf.mxu0
  %v186 = vadd.f32 %v66, %v185
  %187 = vmatmul.bf16.gmra.mxu0 %v103
  %v188 = vpop.f32.mrf.mxu0
  %v189 = vadd.f32 %v66, %v188
  %v190 = vpop.f32.mrf.mxu0
  %v191 = vadd.f32 %v66, %v190
  %192 = vmatmul.bf16.gmra.mxu0 %v104
  %v193 = vpop.f32.mrf.mxu0
  %v194 = vadd.f32 %v66, %v193
  %v195 = vpop.f32.mrf.mxu0
  %v196 = vadd.f32 %v66, %v195
  %197 = vmatmul.bf16.gmra.mxu0 %v105
  %v198 = vpop.f32.mrf.mxu0
  %v199 = vadd.f32 %v66, %v198
  %v200 = vpop.f32.mrf.mxu0
  %v201 = vadd.f32 %v66, %v200
  %202 = vmatmul.bf16.gmra.mxu0 %v106
  %v203 = vpop.f32.mrf.mxu0
  %v204 = vadd.f32 %v66, %v203
  %v205 = vpop.f32.mrf.mxu0
  %v206 = vadd.f32 %v66, %v205
  %207 = vmatmul.bf16.gmra.mxu0 %v107
  %v208 = vpop.f32.mrf.mxu0
  %v209 = vadd.f32 %v66, %v208
  %v210 = vpop.f32.mrf.mxu0
  %v211 = vadd.f32 %v66, %v210
  %212 = vdwg.mxu0
  %v213 = vmax.f32 %v174, 0.0
  %v214 = vmax.f32 %v176, 0.0
  %v215 = vmax.f32 %v179, 0.0
  %v216 = vmax.f32 %v181, 0.0
  %v217 = vmax.f32 %v184, 0.0
  %v218 = vmax.f32 %v186, 0.0
  %v219 = vmax.f32 %v189, 0.0
  %v220 = vmax.f32 %v191, 0.0
  %v221 = vmax.f32 %v194, 0.0
  %v222 = vmax.f32 %v196, 0.0
  %v223 = vmax.f32 %v199, 0.0
  %v224 = vmax.f32 %v201, 0.0
  %v225 = vmax.f32 %v204, 0.0
  %v226 = vmax.f32 %v206, 0.0
  %v227 = vmax.f32 %v209, 0.0
  %v228 = vmax.f32 %v211, 0.0
  %v229 = vpack.c.bf16 %v214, %v213
  %v230 = vpack.c.bf16 %v216, %v215
  %v231 = vpack.c.bf16 %v218, %v217
  %v232 = vpack.c.bf16 %v220, %v219
  %v233 = vpack.c.bf16 %v222, %v221
  %v234 = vpack.c.bf16 %v224, %v223
  %v235 = vpack.c.bf16 %v226, %v225
  %v236 = vpack.c.bf16 %v228, %v227
  %v237 = vld [vmem:[%s3] sm:$0xf]
  %v238 = vld [vmem:[%s3 + $0x4] sm:$0xf]
  %v239 = vld [vmem:[%s3 + $0x8] sm:$0xf]
  %v240 = vld [vmem:[%s3 + $0xc] sm:$0xf]
  %v241 = vld [vmem:[%s3 + $0x10] sm:$0xf]
  %v242 = vld [vmem:[%s3 + $0x14] sm:$0xf]
  %v243 = vld [vmem:[%s3 + $0x18] sm:$0xf]
  %v244 = vld [vmem:[%s3 + $0x1c] sm:$0xf]
  %v245 = vld [vmem:[%s3 + $0x20] sm:$0xf]
  %v246 = vld [vmem:[%s3 + $0x24] sm:$0xf]
  %v247 = vld [vmem:[%s3 + $0x28] sm:$0xf]
  %v248 = vld [vmem:[%s3 + $0x2c] sm:$0xf]
  %v249 = vld [vmem:[%s3 + $0x30] sm:$0xf]
  %v250 = vld [vmem:[%s3 + $0x34] sm:$0xf]
  %v251 = vld [vmem:[%s3 + $0x38] sm:$0xf]
  %v252 = vld [vmem:[%s3 + $0x3c] sm:$0xf]
  %v253 = vld [vmem:[%s4] sm:$0x1]
  %v255 = vperm.slane %v253, 0
  %v273 = vunpack.c.l.b16 %v237
  %v274 = vunpack.c.l.b16 %v238
  %v275 = vunpack.c.l.b16 %v239
  %v276 = vunpack.c.l.b16 %v240
  %v277 = vunpack.c.l.b16 %v241
  %v278 = vunpack.c.l.b16 %v242
  %v279 = vunpack.c.l.b16 %v243
  %v280 = vunpack.c.l.b16 %v244
  %v281 = vunpack.c.l.b16 %v245
  %v282 = vunpack.c.l.b16 %v246
  %v283 = vunpack.c.l.b16 %v247
  %v284 = vunpack.c.l.b16 %v248
  %v285 = vunpack.c.l.b16 %v249
  %v286 = vunpack.c.l.b16 %v250
  %v287 = vunpack.c.l.b16 %v251
  %v288 = vunpack.c.l.b16 %v252
  %v289 = vpack.c.b16 %v274, %v273
  %v290 = vpack.c.b16 %v276, %v275
  %v291 = vpack.c.b16 %v278, %v277
  %v292 = vpack.c.b16 %v280, %v279
  %v293 = vpack.c.b16 %v282, %v281
  %v294 = vpack.c.b16 %v284, %v283
  %v295 = vpack.c.b16 %v286, %v285
  %v296 = vpack.c.b16 %v288, %v287
  %305 = vmatpush.bf16.msra.mxu0 %v296
  %306 = vmatpush.bf16.msra.mxu0 %v295
  %307 = vmatpush.bf16.msra.mxu0 %v294
  %308 = vmatpush.bf16.msra.mxu0 %v293
  %309 = vmatpush.bf16.msra.mxu0 %v292
  %310 = vmatpush.bf16.msra.mxu0 %v291
  %311 = vmatpush.bf16.msra.mxu0 %v290
  %312 = vmatpush.bf16.msra.mxu0 %v289
  %313 = vmatmul.bf16.gmra.mxu0 %v229
  %v314 = vpop.f32.mrf.mxu0
  %v315 = vadd.f32 %v255, %v314
  %v316 = vpop.f32.mrf.mxu0
  %v317 = vadd.f32 %v255, %v316
  %318 = vmatmul.bf16.gmra.mxu0 %v230
  %v319 = vpop.f32.mrf.mxu0
  %v320 = vadd.f32 %v255, %v319
  %v321 = vpop.f32.mrf.mxu0
  %v322 = vadd.f32 %v255, %v321
  %323 = vmatmul.bf16.gmra.mxu0 %v231
  %v324 = vpop.f32.mrf.mxu0
  %v325 = vadd.f32 %v255, %v324
  %v326 = vpop.f32.mrf.mxu0
  %v327 = vadd.f32 %v255, %v326
  %328 = vmatmul.bf16.gmra.mxu0 %v232
  %v329 = vpop.f32.mrf.mxu0
  %v330 = vadd.f32 %v255, %v329
  %v331 = vpop.f32.mrf.mxu0
  %v332 = vadd.f32 %v255, %v331
  %333 = vmatmul.bf16.gmra.mxu0 %v233
  %v334 = vpop.f32.mrf.mxu0
  %v335 = vadd.f32 %v255, %v334
  %v336 = vpop.f32.mrf.mxu0
  %v337 = vadd.f32 %v255, %v336
  %338 = vmatmul.bf16.gmra.mxu0 %v234
  %v339 = vpop.f32.mrf.mxu0
  %v340 = vadd.f32 %v255, %v339
  %v341 = vpop.f32.mrf.mxu0
  %v342 = vadd.f32 %v255, %v341
  %343 = vmatmul.bf16.gmra.mxu0 %v235
  %v344 = vpop.f32.mrf.mxu0
  %v345 = vadd.f32 %v255, %v344
  %v346 = vpop.f32.mrf.mxu0
  %v347 = vadd.f32 %v255, %v346
  %348 = vmatmul.bf16.gmra.mxu0 %v236
  %v349 = vpop.f32.mrf.mxu0
  %v350 = vadd.f32 %v255, %v349
  %v351 = vpop.f32.mrf.mxu0
  %v352 = vadd.f32 %v255, %v351
  %353 = vdwg.mxu0
  %v354 = vmax.f32 %v315, 0.0
  %v355 = vmax.f32 %v317, 0.0
  %v356 = vmax.f32 %v320, 0.0
  %v357 = vmax.f32 %v322, 0.0
  %v358 = vmax.f32 %v325, 0.0
  %v359 = vmax.f32 %v327, 0.0
  %v360 = vmax.f32 %v330, 0.0
  %v361 = vmax.f32 %v332, 0.0
  %v362 = vmax.f32 %v335, 0.0
  %v363 = vmax.f32 %v337, 0.0
  %v364 = vmax.f32 %v340, 0.0
  %v365 = vmax.f32 %v342, 0.0
  %v366 = vmax.f32 %v345, 0.0
  %v367 = vmax.f32 %v347, 0.0
  %v368 = vmax.f32 %v350, 0.0
  %v369 = vmax.f32 %v352, 0.0
  %v370 = vpack.c.bf16 %v355, %v354
  %v371 = vpack.c.bf16 %v357, %v356
  %v372 = vpack.c.bf16 %v359, %v358
  %v373 = vpack.c.bf16 %v361, %v360
  %v374 = vpack.c.bf16 %v363, %v362
  %v375 = vpack.c.bf16 %v365, %v364
  %v376 = vpack.c.bf16 %v367, %v366
  %v377 = vpack.c.bf16 %v369, %v368
  %v378 = vld [vmem:[%s5] sm:$0xf]
  %v379 = vld [vmem:[%s5 + $0x4] sm:$0xf]
  %v380 = vld [vmem:[%s5 + $0x8] sm:$0xf]
  %v381 = vld [vmem:[%s5 + $0xc] sm:$0xf]
  %v382 = vld [vmem:[%s5 + $0x10] sm:$0xf]
  %v383 = vld [vmem:[%s5 + $0x14] sm:$0xf]
  %v384 = vld [vmem:[%s5 + $0x18] sm:$0xf]
  %v385 = vld [vmem:[%s5 + $0x1c] sm:$0xf]
  %v386 = vld [vmem:[%s5 + $0x20] sm:$0xf]
  %v387 = vld [vmem:[%s5 + $0x24] sm:$0xf]
  %v388 = vld [vmem:[%s5 + $0x28] sm:$0xf]
  %v389 = vld [vmem:[%s5 + $0x2c] sm:$0xf]
  %v390 = vld [vmem:[%s5 + $0x30] sm:$0xf]
  %v391 = vld [vmem:[%s5 + $0x34] sm:$0xf]
  %v392 = vld [vmem:[%s5 + $0x38] sm:$0xf]
  %v393 = vld [vmem:[%s5 + $0x3c] sm:$0xf]
  %v394 = vld [vmem:[%s6] sm:$0x1]
  %v396 = vperm.slane %v394, 0
  %v414 = vunpack.c.l.b16 %v378
  %v415 = vunpack.c.l.b16 %v379
  %v416 = vunpack.c.l.b16 %v380
  %v417 = vunpack.c.l.b16 %v381
  %v418 = vunpack.c.l.b16 %v382
  %v419 = vunpack.c.l.b16 %v383
  %v420 = vunpack.c.l.b16 %v384
  %v421 = vunpack.c.l.b16 %v385
  %v422 = vunpack.c.l.b16 %v386
  %v423 = vunpack.c.l.b16 %v387
  %v424 = vunpack.c.l.b16 %v388
  %v425 = vunpack.c.l.b16 %v389
  %v426 = vunpack.c.l.b16 %v390
  %v427 = vunpack.c.l.b16 %v391
  %v428 = vunpack.c.l.b16 %v392
  %v429 = vunpack.c.l.b16 %v393
  %v430 = vpack.c.b16 %v415, %v414
  %v431 = vpack.c.b16 %v417, %v416
  %v432 = vpack.c.b16 %v419, %v418
  %v433 = vpack.c.b16 %v421, %v420
  %v434 = vpack.c.b16 %v423, %v422
  %v435 = vpack.c.b16 %v425, %v424
  %v436 = vpack.c.b16 %v427, %v426
  %v437 = vpack.c.b16 %v429, %v428
  %446 = vmatpush.bf16.msra.mxu0 %v437
  %447 = vmatpush.bf16.msra.mxu0 %v436
  %448 = vmatpush.bf16.msra.mxu0 %v435
  %449 = vmatpush.bf16.msra.mxu0 %v434
  %450 = vmatpush.bf16.msra.mxu0 %v433
  %451 = vmatpush.bf16.msra.mxu0 %v432
  %452 = vmatpush.bf16.msra.mxu0 %v431
  %453 = vmatpush.bf16.msra.mxu0 %v430
  %454 = vmatmul.bf16.gmra.mxu0 %v370
  %v455 = vpop.f32.mrf.mxu0
  %v456 = vadd.f32 %v396, %v455
  %v457 = vpop.f32.mrf.mxu0
  %v458 = vadd.f32 %v396, %v457
  %459 = vmatmul.bf16.gmra.mxu0 %v371
  %v460 = vpop.f32.mrf.mxu0
  %v461 = vadd.f32 %v396, %v460
  %v462 = vpop.f32.mrf.mxu0
  %v463 = vadd.f32 %v396, %v462
  %464 = vmatmul.bf16.gmra.mxu0 %v372
  %v465 = vpop.f32.mrf.mxu0
  %v466 = vadd.f32 %v396, %v465
  %v467 = vpop.f32.mrf.mxu0
  %v468 = vadd.f32 %v396, %v467
  %469 = vmatmul.bf16.gmra.mxu0 %v373
  %v470 = vpop.f32.mrf.mxu0
  %v471 = vadd.f32 %v396, %v470
  %v472 = vpop.f32.mrf.mxu0
  %v473 = vadd.f32 %v396, %v472
  %474 = vmatmul.bf16.gmra.mxu0 %v374
  %v475 = vpop.f32.mrf.mxu0
  %v476 = vadd.f32 %v396, %v475
  %v477 = vpop.f32.mrf.mxu0
  %v478 = vadd.f32 %v396, %v477
  %479 = vmatmul.bf16.gmra.mxu0 %v375
  %v480 = vpop.f32.mrf.mxu0
  %v481 = vadd.f32 %v396, %v480
  %v482 = vpop.f32.mrf.mxu0
  %v483 = vadd.f32 %v396, %v482
  %484 = vmatmul.bf16.gmra.mxu0 %v376
  %v485 = vpop.f32.mrf.mxu0
  %v486 = vadd.f32 %v396, %v485
  %v487 = vpop.f32.mrf.mxu0
  %v488 = vadd.f32 %v396, %v487
  %489 = vmatmul.bf16.gmra.mxu0 %v377
  %v490 = vpop.f32.mrf.mxu0
  %v491 = vadd.f32 %v396, %v490
  %v492 = vpop.f32.mrf.mxu0
  %v493 = vadd.f32 %v396, %v492
  %494 = vdwg.mxu0
  %v495 = vmax.f32 %v456, 0.0
  %v496 = vmax.f32 %v458, 0.0
  %v497 = vmax.f32 %v461, 0.0
  %v498 = vmax.f32 %v463, 0.0
  %v499 = vmax.f32 %v466, 0.0
  %v500 = vmax.f32 %v468, 0.0
  %v501 = vmax.f32 %v471, 0.0
  %v502 = vmax.f32 %v473, 0.0
  %v503 = vmax.f32 %v476, 0.0
  %v504 = vmax.f32 %v478, 0.0
  %v505 = vmax.f32 %v481, 0.0
  %v506 = vmax.f32 %v483, 0.0
  %v507 = vmax.f32 %v486, 0.0
  %v508 = vmax.f32 %v488, 0.0
  %v509 = vmax.f32 %v491, 0.0
  %v510 = vmax.f32 %v493, 0.0
  %v511 = vpack.c.bf16 %v496, %v495
  %v512 = vpack.c.bf16 %v498, %v497
  %v513 = vpack.c.bf16 %v500, %v499
  %v514 = vpack.c.bf16 %v502, %v501
  %v515 = vpack.c.bf16 %v504, %v503
  %v516 = vpack.c.bf16 %v506, %v505
  %v517 = vpack.c.bf16 %v508, %v507
  %v518 = vpack.c.bf16 %v510, %v509
  %v519 = vld [vmem:[%s7] sm:$0xf]
  %v520 = vld [vmem:[%s7 + $0x4] sm:$0xf]
  %v521 = vld [vmem:[%s7 + $0x8] sm:$0xf]
  %v522 = vld [vmem:[%s7 + $0xc] sm:$0xf]
  %v523 = vld [vmem:[%s7 + $0x10] sm:$0xf]
  %v524 = vld [vmem:[%s7 + $0x14] sm:$0xf]
  %v525 = vld [vmem:[%s7 + $0x18] sm:$0xf]
  %v526 = vld [vmem:[%s7 + $0x1c] sm:$0xf]
  %v527 = vld [vmem:[%s7 + $0x20] sm:$0xf]
  %v528 = vld [vmem:[%s7 + $0x24] sm:$0xf]
  %v529 = vld [vmem:[%s7 + $0x28] sm:$0xf]
  %v530 = vld [vmem:[%s7 + $0x2c] sm:$0xf]
  %v531 = vld [vmem:[%s7 + $0x30] sm:$0xf]
  %v532 = vld [vmem:[%s7 + $0x34] sm:$0xf]
  %v533 = vld [vmem:[%s7 + $0x38] sm:$0xf]
  %v534 = vld [vmem:[%s7 + $0x3c] sm:$0xf]
  %v535 = vld [vmem:[%s8] sm:$0x1]
  %v537 = vperm.slane %v535, 0
  %v555 = vunpack.c.l.b16 %v519
  %v556 = vunpack.c.l.b16 %v520
  %v557 = vunpack.c.l.b16 %v521
  %v558 = vunpack.c.l.b16 %v522
  %v559 = vunpack.c.l.b16 %v523
  %v560 = vunpack.c.l.b16 %v524
  %v561 = vunpack.c.l.b16 %v525
  %v562 = vunpack.c.l.b16 %v526
  %v563 = vunpack.c.l.b16 %v527
  %v564 = vunpack.c.l.b16 %v528
  %v565 = vunpack.c.l.b16 %v529
  %v566 = vunpack.c.l.b16 %v530
  %v567 = vunpack.c.l.b16 %v531
  %v568 = vunpack.c.l.b16 %v532
  %v569 = vunpack.c.l.b16 %v533
  %v570 = vunpack.c.l.b16 %v534
  %v571 = vpack.c.b16 %v556, %v555
  %v572 = vpack.c.b16 %v558, %v557
  %v573 = vpack.c.b16 %v560, %v559
  %v574 = vpack.c.b16 %v562, %v561
  %v575 = vpack.c.b16 %v564, %v563
  %v576 = vpack.c.b16 %v566, %v565
  %v577 = vpack.c.b16 %v568, %v567
  %v578 = vpack.c.b16 %v570, %v569
  %587 = vmatpush.bf16.msra.mxu0 %v578
  %588 = vmatpush.bf16.msra.mxu0 %v577
  %589 = vmatpush.bf16.msra.mxu0 %v576
  %590 = vmatpush.bf16.msra.mxu0 %v575
  %591 = vmatpush.bf16.msra.mxu0 %v574
  %592 = vmatpush.bf16.msra.mxu0 %v573
  %593 = vmatpush.bf16.msra.mxu0 %v572
  %594 = vmatpush.bf16.msra.mxu0 %v571
  %595 = vmatmul.bf16.gmra.mxu0 %v511
  %v596 = vpop.f32.mrf.mxu0
  %v597 = vadd.f32 %v537, %v596
  %v598 = vpop.f32.mrf.mxu0
  %v599 = vadd.f32 %v537, %v598
  %600 = vmatmul.bf16.gmra.mxu0 %v512
  %v601 = vpop.f32.mrf.mxu0
  %v602 = vadd.f32 %v537, %v601
  %v603 = vpop.f32.mrf.mxu0
  %v604 = vadd.f32 %v537, %v603
  %605 = vmatmul.bf16.gmra.mxu0 %v513
  %v606 = vpop.f32.mrf.mxu0
  %v607 = vadd.f32 %v537, %v606
  %v608 = vpop.f32.mrf.mxu0
  %v609 = vadd.f32 %v537, %v608
  %610 = vmatmul.bf16.gmra.mxu0 %v514
  %v611 = vpop.f32.mrf.mxu0
  %v612 = vadd.f32 %v537, %v611
  %v613 = vpop.f32.mrf.mxu0
  %v614 = vadd.f32 %v537, %v613
  %615 = vmatmul.bf16.gmra.mxu0 %v515
  %v616 = vpop.f32.mrf.mxu0
  %v617 = vadd.f32 %v537, %v616
  %v618 = vpop.f32.mrf.mxu0
  %v619 = vadd.f32 %v537, %v618
  %620 = vmatmul.bf16.gmra.mxu0 %v516
  %v621 = vpop.f32.mrf.mxu0
  %v622 = vadd.f32 %v537, %v621
  %v623 = vpop.f32.mrf.mxu0
  %v624 = vadd.f32 %v537, %v623
  %625 = vmatmul.bf16.gmra.mxu0 %v517
  %v626 = vpop.f32.mrf.mxu0
  %v627 = vadd.f32 %v537, %v626
  %v628 = vpop.f32.mrf.mxu0
  %v629 = vadd.f32 %v537, %v628
  %630 = vmatmul.bf16.gmra.mxu0 %v518
  %v631 = vpop.f32.mrf.mxu0
  %v632 = vadd.f32 %v537, %v631
  %v633 = vpop.f32.mrf.mxu0
  %v634 = vadd.f32 %v537, %v633
  %635 = vdwg.mxu0
  %v636 = vlaneseq
  %v637 = vand.u32 %v636, 127
  %vm638 = vcmp.lt.s32.totalorder %v637, 32
  %v639 = vsel %vm638, %v597, -inf
  %v640 = vsel %vm638, %v599, -inf
  %v641 = vsel %vm638, %v602, -inf
  %v642 = vsel %vm638, %v604, -inf
  %v643 = vsel %vm638, %v607, -inf
  %v644 = vsel %vm638, %v609, -inf
  %v645 = vsel %vm638, %v612, -inf
  %v646 = vsel %vm638, %v614, -inf
  %v647 = vsel %vm638, %v617, -inf
  %v648 = vsel %vm638, %v619, -inf
  %v649 = vsel %vm638, %v622, -inf
  %v650 = vsel %vm638, %v624, -inf
  %v651 = vsel %vm638, %v627, -inf
  %v652 = vsel %vm638, %v629, -inf
  %v653 = vsel %vm638, %v632, -inf
  %v654 = vsel %vm638, %v634, -inf
  %655 = vmax.xlane.f32.xlu0 %v639
  %v656 = vpop.xlane.xlu0 %655
  %657 = vmax.xlane.f32.xlu0 %v640
  %v658 = vpop.xlane.xlu0 %657
  %659 = vmax.xlane.f32.xlu0 %v641
  %v660 = vpop.xlane.xlu0 %659
  %661 = vmax.xlane.f32.xlu0 %v642
  %v662 = vpop.xlane.xlu0 %661
  %663 = vmax.xlane.f32.xlu0 %v643
  %v664 = vpop.xlane.xlu0 %663
  %665 = vmax.xlane.f32.xlu0 %v644
  %v666 = vpop.xlane.xlu0 %665
  %667 = vmax.xlane.f32.xlu0 %v645
  %v668 = vpop.xlane.xlu0 %667
  %669 = vmax.xlane.f32.xlu0 %v646
  %v670 = vpop.xlane.xlu0 %669
  %671 = vmax.xlane.f32.xlu0 %v647
  %v672 = vpop.xlane.xlu0 %671
  %673 = vmax.xlane.f32.xlu0 %v648
  %v674 = vpop.xlane.xlu0 %673
  %675 = vmax.xlane.f32.xlu0 %v649
  %v676 = vpop.xlane.xlu0 %675
  %677 = vmax.xlane.f32.xlu0 %v650
  %v678 = vpop.xlane.xlu0 %677
  %679 = vmax.xlane.f32.xlu0 %v651
  %v680 = vpop.xlane.xlu0 %679
  %681 = vmax.xlane.f32.xlu0 %v652
  %v682 = vpop.xlane.xlu0 %681
  %683 = vmax.xlane.f32.xlu0 %v653
  %v684 = vpop.xlane.xlu0 %683
  %685 = vmax.xlane.f32.xlu0 %v654
  %v686 = vpop.xlane.xlu0 %685
  %v687 = vsub.f32 %v639, %v656
  %v688 = vsub.f32 %v640, %v658
  %v689 = vsub.f32 %v641, %v660
  %v690 = vsub.f32 %v642, %v662
  %v691 = vsub.f32 %v643, %v664
  %v692 = vsub.f32 %v644, %v666
  %v693 = vsub.f32 %v645, %v668
  %v694 = vsub.f32 %v646, %v670
  %v695 = vsub.f32 %v647, %v672
  %v696 = vsub.f32 %v648, %v674
  %v697 = vsub.f32 %v649, %v676
  %v698 = vsub.f32 %v650, %v678
  %v699 = vsub.f32 %v651, %v680
  %v700 = vsub.f32 %v652, %v682
  %v701 = vsub.f32 %v653, %v684
  %v702 = vsub.f32 %v654, %v686
  %v703 = vmul.f32 %v687, 1.442695
  %v704 = vpow.pop %v703
  %v705 = vmul.f32 %v688, 1.442695
  %v706 = vpow.pop %v705
  %v707 = vmul.f32 %v689, 1.442695
  %v708 = vpow.pop %v707
  %v709 = vmul.f32 %v690, 1.442695
  %v710 = vpow.pop %v709
  %v711 = vmul.f32 %v691, 1.442695
  %v712 = vpow.pop %v711
  %v713 = vmul.f32 %v692, 1.442695
  %v714 = vpow.pop %v713
  %v715 = vmul.f32 %v693, 1.442695
  %v716 = vpow.pop %v715
  %v717 = vmul.f32 %v694, 1.442695
  %v718 = vpow.pop %v717
  %v719 = vmul.f32 %v695, 1.442695
  %v720 = vpow.pop %v719
  %v721 = vmul.f32 %v696, 1.442695
  %v722 = vpow.pop %v721
  %v723 = vmul.f32 %v697, 1.442695
  %v724 = vpow.pop %v723
  %v725 = vmul.f32 %v698, 1.442695
  %v726 = vpow.pop %v725
  %v727 = vmul.f32 %v699, 1.442695
  %v728 = vpow.pop %v727
  %v729 = vmul.f32 %v700, 1.442695
  %v730 = vpow.pop %v729
  %v731 = vmul.f32 %v701, 1.442695
  %v732 = vpow.pop %v731
  %v733 = vmul.f32 %v702, 1.442695
  %v734 = vpow.pop %v733
  %735 = vadd.xlane.f32.xlu0 %v704
  %v736 = vpop.xlane.xlu0 %735
  %737 = vadd.xlane.f32.xlu0 %v706
  %v738 = vpop.xlane.xlu0 %737
  %739 = vadd.xlane.f32.xlu0 %v708
  %v740 = vpop.xlane.xlu0 %739
  %741 = vadd.xlane.f32.xlu0 %v710
  %v742 = vpop.xlane.xlu0 %741
  %743 = vadd.xlane.f32.xlu0 %v712
  %v744 = vpop.xlane.xlu0 %743
  %745 = vadd.xlane.f32.xlu0 %v714
  %v746 = vpop.xlane.xlu0 %745
  %747 = vadd.xlane.f32.xlu0 %v716
  %v748 = vpop.xlane.xlu0 %747
  %749 = vadd.xlane.f32.xlu0 %v718
  %v750 = vpop.xlane.xlu0 %749
  %751 = vadd.xlane.f32.xlu0 %v720
  %v752 = vpop.xlane.xlu0 %751
  %753 = vadd.xlane.f32.xlu0 %v722
  %v754 = vpop.xlane.xlu0 %753
  %755 = vadd.xlane.f32.xlu0 %v724
  %v756 = vpop.xlane.xlu0 %755
  %757 = vadd.xlane.f32.xlu0 %v726
  %v758 = vpop.xlane.xlu0 %757
  %759 = vadd.xlane.f32.xlu0 %v728
  %v760 = vpop.xlane.xlu0 %759
  %761 = vadd.xlane.f32.xlu0 %v730
  %v762 = vpop.xlane.xlu0 %761
  %763 = vadd.xlane.f32.xlu0 %v732
  %v764 = vpop.xlane.xlu0 %763
  %765 = vadd.xlane.f32.xlu0 %v734
  %v766 = vpop.xlane.xlu0 %765
  %v767 = vrcp.pop %v736
  %v768 = vrcp.pop %v738
  %v769 = vrcp.pop %v740
  %v770 = vrcp.pop %v742
  %v771 = vrcp.pop %v744
  %v772 = vrcp.pop %v746
  %v773 = vrcp.pop %v748
  %v774 = vrcp.pop %v750
  %v775 = vrcp.pop %v752
  %v776 = vrcp.pop %v754
  %v777 = vrcp.pop %v756
  %v778 = vrcp.pop %v758
  %v779 = vrcp.pop %v760
  %v780 = vrcp.pop %v762
  %v781 = vrcp.pop %v764
  %v782 = vrcp.pop %v766
  %v783 = vmul.f32 %v704, %v767
  %v784 = vmul.f32 %v706, %v768
  %v785 = vmul.f32 %v708, %v769
  %v786 = vmul.f32 %v710, %v770
  %v787 = vmul.f32 %v712, %v771
  %v788 = vmul.f32 %v714, %v772
  %v789 = vmul.f32 %v716, %v773
  %v790 = vmul.f32 %v718, %v774
  %v791 = vmul.f32 %v720, %v775
  %v792 = vmul.f32 %v722, %v776
  %v793 = vmul.f32 %v724, %v777
  %v794 = vmul.f32 %v726, %v778
  %v795 = vmul.f32 %v728, %v779
  %v796 = vmul.f32 %v730, %v780
  %v797 = vmul.f32 %v732, %v781
  %v798 = vmul.f32 %v734, %v782
  %799 = vst [vmem:[%s9] sm:$0xff] %v783
  %800 = vst [vmem:[%s9 + $0x8] sm:$0xff] %v784
  %801 = vst [vmem:[%s9 + $0x10] sm:$0xff] %v785
  %802 = vst [vmem:[%s9 + $0x18] sm:$0xff] %v786
  %803 = vst [vmem:[%s9 + $0x20] sm:$0xff] %v787
  %804 = vst [vmem:[%s9 + $0x28] sm:$0xff] %v788
  %805 = vst [vmem:[%s9 + $0x30] sm:$0xff] %v789
  %806 = vst [vmem:[%s9 + $0x38] sm:$0xff] %v790
  %807 = vst [vmem:[%s9 + $0x40] sm:$0xff] %v791
  %808 = vst [vmem:[%s9 + $0x48] sm:$0xff] %v792
  %809 = vst [vmem:[%s9 + $0x50] sm:$0xff] %v793
  %810 = vst [vmem:[%s9 + $0x58] sm:$0xff] %v794
  %811 = vst [vmem:[%s9 + $0x60] sm:$0xff] %v795
  %812 = vst [vmem:[%s9 + $0x68] sm:$0xff] %v796
  %813 = vst [vmem:[%s9 + $0x70] sm:$0xff] %v797
  %814 = vst [vmem:[%s9 + $0x78] sm:$0xff] %v798
  // Predicated region
  $region38: #{word_embedding_forward.1} parent=0 // pred_check
    _
  $region39: #{word_embedding_forward.1} parent=0 // pred_check_branch
    %816 = sbr.rel (0) target = $region41
  $region40: #{word_embedding_forward.1} parent=0 // pred_region
    _
  $region41: #{word_embedding_forward.1} parent=0 // pred_fallthru
    _
  // Predicated region
  $region42: #{word_embedding_forward.1} parent=0 // pred_check
    _
  $region43: #{word_embedding_forward.1} parent=0 // pred_check_branch
    %818 = sbr.rel (0) target = $region45
  $region44: #{word_embedding_forward.1} parent=0 // pred_region
    _
  $region45: #{word_embedding_forward.1} parent=0 // pred_fallthru
    _

</llo_original>
